<compile_context>
chip_gen: v5e
topology: v5e:2x2
jax: 0.10.0
libtpu: 0.0.40
codegen_flags: <defaults>
</compile_context>

<pallas_src>
import functools

import jax
import jax.numpy as jnp
from jax import lax
from jax.experimental import pallas as pl
from jax.experimental.pallas import tpu as pltpu

EPS = 1e-5


def basic_block_kernel(a_ref, m1_ref, m2_ref, rmask8_ref, rmcol_ref, q2_ref,
                       g1_ref, b1_ref, g2_ref, b2_ref, out_ref, *, inv_count):
    """All refs are whole-array VMEM blocks.

    a_ref       : (Rpad, L)   folded, H-padded input; pad rows are exactly zero (f32)
    m1/m2_ref   : (3L, L)     stacked block-tridiagonal conv weights, bf16
    rmask8_ref  : (8, Rpad)   valid-row mask replicated on 8 sublanes (f32)
    rmcol_ref   : (Rpad, 1)   valid-row mask as a column (f32)
    q2_ref      : (2L, 2L)    block-diag per-channel sum-broadcast matrix (f32)
    g*/b*_ref   : (1, L)      BN gamma/beta tiled across the W lane groups (f32)
    out_ref     : (Rpad, L)   folded output (pad rows hold garbage; wrapper slices)
    """
    a = a_ref[...]
    rmask8 = rmask8_ref[...]
    rmcol = rmcol_ref[...]
    q2 = q2_ref[...]
    L = a.shape[1]

    def taps3(x):
        # (Rpad, 3L) lane-concat of the three vertical-tap views of x:
        # lanes [0:L] = x[r-1], [L:2L] = x[r], [2L:3L] = x[r+1].
        # Edge rows read zeros; they only feed pad/garbage output rows.
        z = jnp.zeros((1, L), x.dtype)
        up = jnp.concatenate([z, x[:-1, :]], axis=0)     # kh = 0 tap: x[r-1]
        dn = jnp.concatenate([x[1:, :], z], axis=0)      # kh = 2 tap: x[r+1]
        return jnp.concatenate([up, x, dn], axis=-1)

    def conv3x3(x, m_ref):
        # Single K = 3L matmul per conv; bf16 operands, f32 MXU accumulate.
        x3 = taps3(x).astype(jnp.bfloat16)
        return jnp.dot(x3, m_ref[...], preferred_element_type=jnp.float32)

    def batchnorm(y, g, b):
        # Per-channel sums of [y | y*y] over *valid* rows in one M=8, f32 matmul,
        # then one matmul against block-diag Q2 broadcasts each channel's sums
        # back to every lane of that channel.
        yy = jnp.concatenate([y, y * y], axis=-1)                          # (Rpad, 2L)
        sums = jnp.dot(rmask8, yy, preferred_element_type=jnp.float32)     # (8, 2L)
        bc = jnp.dot(sums, q2, preferred_element_type=jnp.float32)         # (8, 2L)
        mean = bc[0:1, :L] * inv_count                                     # (1, L)
        msq = bc[0:1, L:] * inv_count                                      # (1, L)
        var = msq - mean * mean                   # biased (training-mode) variance
        inv = lax.rsqrt(var + EPS)
        return (y - mean) * (inv * g) + b

    # ---- conv1 -> bn1 -> relu -> mask pad rows ----
    y1 = conv3x3(a, m1_ref)
    y1 = jnp.maximum(batchnorm(y1, g1_ref[...], b1_ref[...]), 0.0) * rmcol

    # ---- conv2 -> bn2 ----  (pad rows of y1 are exact zeros, so the vertical
    # zero-padding of conv2 is correct without any shift matrices)
    y2 = batchnorm(conv3x3(y1, m2_ref), g2_ref[...], b2_ref[...])

    # ---- residual add + relu (a == x on valid rows) ----
    out_ref[...] = jnp.maximum(y2 + a, 0.0).astype(out_ref.dtype)


def _fold_conv_weight(w_oihw, W, C):
    """PyTorch OIHW (Cout, Cin, 3, 3) -> (3*W*C, W*C) stacked block-tridiagonal mats.

    Block kh (rows [kh*L:(kh+1)*L]) bakes the three kw taps of conv-weight row kh,
    the horizontal shift, horizontal edge zeroing and the Cin->Cout mix into a single
    matmul operand. Row index = (w_in, ci), col index = (w_out, co).
    """
    wt = jnp.transpose(w_oihw, (2, 3, 1, 0)).astype(jnp.float32)   # (kh, kw, Cin, Cout)
    w_in = jnp.arange(W)[:, None]
    w_out = jnp.arange(W)[None, :]
    dw = w_in - w_out                                              # (W, W)
    valid = (jnp.abs(dw) <= 1).astype(jnp.float32)
    kw_idx = jnp.clip(dw, -1, 1) + 1                               # in {0, 1, 2}
    taps = wt[:, kw_idx]                                           # (3, W, W, Cin, Cout)
    taps = taps * valid[None, :, :, None, None]
    m = jnp.transpose(taps, (0, 1, 3, 2, 4)).reshape(3, W * C, W * C)
    return m.reshape(3 * W * C, W * C)


def prepare_basic_block_params(w1, g1, b1, w2, g2, b2, *, N, H, W, C):
    """One-time folding of weights + shape constants (hoisted out of the hot path)."""
    L = W * C
    if L % 128 != 0:
        raise ValueError(f"folded lane width W*C={L} must be a multiple of 128")
    Hp = H + 2
    R = N * Hp
    Rpad = -(-R // 8) * 8                                          # round up to 8 rows

    m1s = _fold_conv_weight(w1, W, C).astype(jnp.bfloat16)         # (3L, L) bf16
    m2s = _fold_conv_weight(w2, W, C).astype(jnp.bfloat16)

    hp = jnp.arange(Rpad) % Hp
    valid = ((jnp.arange(Rpad) < R) & (hp >= 1) & (hp <= H)).astype(jnp.float32)
    rmask8 = jnp.tile(valid.reshape(1, Rpad), (8, 1))              # (8, Rpad)
    rmcol = valid.reshape(Rpad, 1)                                 # (Rpad, 1)

    idx = jnp.arange(2 * L)
    same_half = (idx[:, None] // L) == (idx[None, :] // L)
    same_ch = ((idx[:, None] % L) % C) == ((idx[None, :] % L) % C)
    q2 = (same_half & same_ch).astype(jnp.float32)                 # (2L, 2L)

    tile_c = lambda v: jnp.tile(v.astype(jnp.float32), W).reshape(1, L)
    return (m1s, m2s, rmask8, rmcol, q2,
            tile_c(g1), tile_c(b1), tile_c(g2), tile_c(b2))


@jax.jit
def basic_block_forward(x_nchw, m1s, m2s, rmask8, rmcol, q2, g1t, b1t, g2t, b2t):
    """x_nchw: (N, C, H, W); remaining args come from prepare_basic_block_params."""
    N, C, H, W = x_nchw.shape
    Hp, R, L = H + 2, N * (H + 2), W * C
    Rpad = rmcol.shape[0]

    x = jnp.transpose(x_nchw, (0, 2, 3, 1)).astype(jnp.float32)    # NCHW -> NHWC
    # Folded, H-padded, 8-row-aligned input slab; all pad rows are exactly zero.
    a = jnp.pad(x, ((0, 0), (1, 1), (0, 0), (0, 0))).reshape(R, L)
    a = jnp.pad(a, ((0, Rpad - R), (0, 0)))

    kernel = functools.partial(basic_block_kernel,
                               inv_count=1.0 / float(N * H * W))
    vmem_spec = pl.BlockSpec(memory_space=pltpu.MemorySpace.VMEM)
    out_folded = pl.pallas_call(
        kernel,
        out_shape=jax.ShapeDtypeStruct((Rpad, L), jnp.float32),
        in_specs=[vmem_spec] * 10,
        out_specs=vmem_spec,
        compiler_params=pltpu.CompilerParams(
            vmem_limit_bytes=32 * 1024 * 1024),   # safe on v7x's 64 MiB VMEM too
    )(a, m1s, m2s, rmask8, rmcol, q2, g1t, b1t, g2t, b2t)

    out = out_folded[:R].reshape(N, Hp, W, C)[:, 1:H + 1]          # drop pad rows
    return jnp.transpose(out, (0, 3, 1, 2)).astype(x_nchw.dtype)   # NHWC -> NCHW


def reference_basic_block(x, w1, g1, b1, w2, g2, b2):
    """Pure-JAX (XLA) NCHW reference, PyTorch training-mode BN.

    Conv operands are cast to bf16 with f32 accumulation to mirror the kernel's
    MXU numerics; everything else stays f32.
    """
    def conv(x, w):
        return lax.conv_general_dilated(
            x.astype(jnp.bfloat16), w.astype(jnp.bfloat16),
            window_strides=(1, 1), padding=((1, 1), (1, 1)),
            dimension_numbers=("NCHW", "OIHW", "NCHW"),
            preferred_element_type=jnp.float32)

    def bn(y, g, b):
        m = jnp.mean(y, axis=(0, 2, 3), keepdims=True)
        v = jnp.mean(y * y, axis=(0, 2, 3), keepdims=True) - m * m
        return (y - m) * lax.rsqrt(v + EPS) * g.reshape(1, -1, 1, 1) + b.reshape(1, -1, 1, 1)

    out = jnp.maximum(bn(conv(x, w1), g1, b1), 0.0)
    out = bn(conv(out, w2), g2, b2)
    return jnp.maximum(out + x, 0.0)


if __name__ == "__main__":
    # Small shapes: inplanes == planes (identity residual), stride=1.
    # W * C = 16 * 8 = 128 -> exactly lane-dense folded layout.
    N, C, H, W = 2, 8, 16, 16

    key = jax.random.PRNGKey(0)
    kx, kw1, kw2, kg1, kb1, kg2, kb2 = jax.random.split(key, 7)

    x = jax.random.normal(kx, (N, C, H, W), jnp.float32)
    w1 = jax.random.normal(kw1, (C, C, 3, 3), jnp.float32) * 0.1   # conv1 (OIHW)
    w2 = jax.random.normal(kw2, (C, C, 3, 3), jnp.float32) * 0.1   # conv2 (OIHW)
    g1 = 1.0 + 0.1 * jax.random.normal(kg1, (C,), jnp.float32)     # bn1 gamma
    b1 = 0.1 * jax.random.normal(kb1, (C,), jnp.float32)           # bn1 beta
    g2 = 1.0 + 0.1 * jax.random.normal(kg2, (C,), jnp.float32)     # bn2 gamma
    b2 = 0.1 * jax.random.normal(kb2, (C,), jnp.float32)           # bn2 beta

    # One-time weight folding / constant construction (not in the per-call path).
    params = prepare_basic_block_params(w1, g1, b1, w2, g2, b2, N=N, H=H, W=W, C=C)

    out = jax.block_until_ready(basic_block_forward(x, *params))
    ref = jax.block_until_ready(reference_basic_block(x, w1, g1, b1, w2, g2, b2))

    assert out.shape == (N, C, H, W), out.shape
    max_err = float(jnp.max(jnp.abs(out - ref)))
    # bf16 conv operands (f32 accumulate) in both kernel and reference; residual
    # differences are f32 accumulation-order noise + rare bf16 rounding flips.
    assert jnp.allclose(out, ref, atol=1e-2, rtol=1e-2), f"max abs err = {max_err}"

    print("KERNEL_OK")
</pallas_src>

<mosaic_0001>
module attributes {stable_mosaic.version = 11 : i64} {
  func.func @basic_block_kernel(%arg0: memref<40x128xf32, #tpu.memory_space<vmem>>, %arg1: memref<384x128xbf16, #tpu.memory_space<vmem>>, %arg2: memref<384x128xbf16, #tpu.memory_space<vmem>>, %arg3: memref<8x40xf32, #tpu.memory_space<vmem>>, %arg4: memref<40x1xf32, #tpu.memory_space<vmem>>, %arg5: memref<256x256xf32, #tpu.memory_space<vmem>>, %arg6: memref<1x128xf32, #tpu.memory_space<vmem>>, %arg7: memref<1x128xf32, #tpu.memory_space<vmem>>, %arg8: memref<1x128xf32, #tpu.memory_space<vmem>>, %arg9: memref<1x128xf32, #tpu.memory_space<vmem>>, %arg10: memref<40x128xf32, #tpu.memory_space<vmem>>) attributes {dimension_semantics = [], scalar_prefetch = 0 : i64, scratch_operands = 0 : i64, tpu.core_type = #tpu.core_type<tc>} {
    %c0 = arith.constant 0 : index
    %c0_0 = arith.constant 0 : index
    %0 = vector.load %arg0[%c0, %c0_0] : memref<40x128xf32, #tpu.memory_space<vmem>>, vector<40x128xf32>
    %c0_1 = arith.constant 0 : index
    %c0_2 = arith.constant 0 : index
    %1 = vector.load %arg3[%c0_1, %c0_2] : memref<8x40xf32, #tpu.memory_space<vmem>>, vector<8x40xf32>
    %c0_3 = arith.constant 0 : index
    %c0_4 = arith.constant 0 : index
    %2 = vector.load %arg4[%c0_3, %c0_4] : memref<40x1xf32, #tpu.memory_space<vmem>>, vector<40x1xf32>
    %c0_5 = arith.constant 0 : index
    %c0_6 = arith.constant 0 : index
    %3 = vector.load %arg5[%c0_5, %c0_6] : memref<256x256xf32, #tpu.memory_space<vmem>>, vector<256x256xf32>
    %cst = arith.constant 0.000000e+00 : f32
    %4 = vector.broadcast %cst : f32 to vector<1x128xf32>
    %5 = vector.extract_strided_slice %0 {offsets = [0, 0], sizes = [39, 128], strides = [1, 1]} : vector<40x128xf32> to vector<39x128xf32>
    %6 = tpu.concatenate %4, %5 in 0 : vector<1x128xf32>, vector<39x128xf32> -> vector<40x128xf32>
    %7 = vector.extract_strided_slice %0 {offsets = [1, 0], sizes = [39, 128], strides = [1, 1]} : vector<40x128xf32> to vector<39x128xf32>
    %8 = tpu.concatenate %7, %4 in 0 : vector<39x128xf32>, vector<1x128xf32> -> vector<40x128xf32>
    %9 = tpu.concatenate %6, %0, %8 in 1 : vector<40x128xf32>, vector<40x128xf32>, vector<40x128xf32> -> vector<40x384xf32>
    %10 = arith.truncf %9 : vector<40x384xf32> to vector<40x384xbf16>
    %c0_7 = arith.constant 0 : index
    %c0_8 = arith.constant 0 : index
    %11 = vector.load %arg1[%c0_7, %c0_8] : memref<384x128xbf16, #tpu.memory_space<vmem>>, vector<384x128xbf16>
    %cst_9 = arith.constant dense<0.000000e+00> : vector<40x128xf32>
    %12 = tpu.matmul %10, %11, %cst_9 {dimension_numbers = #tpu.dot_dimension_numbers<[1], [0], [0], [1], [0, 0, 1, 1], [], []>} : vector<40x384xbf16>, vector<384x128xbf16>, vector<40x128xf32> -> vector<40x128xf32>
    %c0_10 = arith.constant 0 : index
    %c0_11 = arith.constant 0 : index
    %13 = vector.load %arg6[%c0_10, %c0_11] : memref<1x128xf32, #tpu.memory_space<vmem>>, vector<1x128xf32>
    %c0_12 = arith.constant 0 : index
    %c0_13 = arith.constant 0 : index
    %14 = vector.load %arg7[%c0_12, %c0_13] : memref<1x128xf32, #tpu.memory_space<vmem>>, vector<1x128xf32>
    %15 = arith.mulf %12, %12 : vector<40x128xf32>
    %16 = tpu.concatenate %12, %15 in 1 : vector<40x128xf32>, vector<40x128xf32> -> vector<40x256xf32>
    %cst_14 = arith.constant dense<0.000000e+00> : vector<8x256xf32>
    %17 = tpu.matmul %1, %16, %cst_14 {dimension_numbers = #tpu.dot_dimension_numbers<[1], [0], [0], [1], [0, 0, 1, 1], [], []>} : vector<8x40xf32>, vector<40x256xf32>, vector<8x256xf32> -> vector<8x256xf32>
    %cst_15 = arith.constant dense<0.000000e+00> : vector<8x256xf32>
    %18 = tpu.matmul %17, %3, %cst_15 {dimension_numbers = #tpu.dot_dimension_numbers<[1], [0], [0], [1], [0, 0, 1, 1], [], []>} : vector<8x256xf32>, vector<256x256xf32>, vector<8x256xf32> -> vector<8x256xf32>
    %19 = vector.extract_strided_slice %18 {offsets = [0, 0], sizes = [1, 128], strides = [1, 1]} : vector<8x256xf32> to vector<1x128xf32>
    %cst_16 = arith.constant 0.001953125 : f32
    %20 = vector.broadcast %cst_16 : f32 to vector<1x128xf32>
    %21 = arith.mulf %19, %20 : vector<1x128xf32>
    %22 = vector.extract_strided_slice %18 {offsets = [0, 128], sizes = [1, 128], strides = [1, 1]} : vector<8x256xf32> to vector<1x128xf32>
    %cst_17 = arith.constant 0.001953125 : f32
    %23 = vector.broadcast %cst_17 : f32 to vector<1x128xf32>
    %24 = arith.mulf %22, %23 : vector<1x128xf32>
    %25 = arith.mulf %21, %21 : vector<1x128xf32>
    %26 = arith.subf %24, %25 : vector<1x128xf32>
    %cst_18 = arith.constant 9.99999974E-6 : f32
    %27 = vector.broadcast %cst_18 : f32 to vector<1x128xf32>
    %28 = arith.addf %26, %27 : vector<1x128xf32>
    %29 = math.rsqrt %28 : vector<1x128xf32>
    %30 = vector.broadcast %21 : vector<1x128xf32> to vector<40x128xf32>
    %31 = arith.subf %12, %30 : vector<40x128xf32>
    %32 = arith.mulf %29, %13 : vector<1x128xf32>
    %33 = vector.broadcast %32 : vector<1x128xf32> to vector<40x128xf32>
    %34 = arith.mulf %31, %33 : vector<40x128xf32>
    %35 = vector.broadcast %14 : vector<1x128xf32> to vector<40x128xf32>
    %36 = arith.addf %34, %35 : vector<40x128xf32>
    %cst_19 = arith.constant 0.000000e+00 : f32
    %37 = vector.broadcast %cst_19 : f32 to vector<40x128xf32>
    %38 = arith.maximumf %36, %37 : vector<40x128xf32>
    %39 = vector.broadcast %2 : vector<40x1xf32> to vector<40x128xf32>
    %40 = arith.mulf %38, %39 : vector<40x128xf32>
    %cst_20 = arith.constant 0.000000e+00 : f32
    %41 = vector.broadcast %cst_20 : f32 to vector<1x128xf32>
    %42 = vector.extract_strided_slice %40 {offsets = [0, 0], sizes = [39, 128], strides = [1, 1]} : vector<40x128xf32> to vector<39x128xf32>
    %43 = tpu.concatenate %41, %42 in 0 : vector<1x128xf32>, vector<39x128xf32> -> vector<40x128xf32>
    %44 = vector.extract_strided_slice %40 {offsets = [1, 0], sizes = [39, 128], strides = [1, 1]} : vector<40x128xf32> to vector<39x128xf32>
    %45 = tpu.concatenate %44, %41 in 0 : vector<39x128xf32>, vector<1x128xf32> -> vector<40x128xf32>
    %46 = tpu.concatenate %43, %40, %45 in 1 : vector<40x128xf32>, vector<40x128xf32>, vector<40x128xf32> -> vector<40x384xf32>
    %47 = arith.truncf %46 : vector<40x384xf32> to vector<40x384xbf16>
    %c0_21 = arith.constant 0 : index
    %c0_22 = arith.constant 0 : index
    %48 = vector.load %arg2[%c0_21, %c0_22] : memref<384x128xbf16, #tpu.memory_space<vmem>>, vector<384x128xbf16>
    %cst_23 = arith.constant dense<0.000000e+00> : vector<40x128xf32>
    %49 = tpu.matmul %47, %48, %cst_23 {dimension_numbers = #tpu.dot_dimension_numbers<[1], [0], [0], [1], [0, 0, 1, 1], [], []>} : vector<40x384xbf16>, vector<384x128xbf16>, vector<40x128xf32> -> vector<40x128xf32>
    %c0_24 = arith.constant 0 : index
    %c0_25 = arith.constant 0 : index
    %50 = vector.load %arg8[%c0_24, %c0_25] : memref<1x128xf32, #tpu.memory_space<vmem>>, vector<1x128xf32>
    %c0_26 = arith.constant 0 : index
    %c0_27 = arith.constant 0 : index
    %51 = vector.load %arg9[%c0_26, %c0_27] : memref<1x128xf32, #tpu.memory_space<vmem>>, vector<1x128xf32>
    %52 = arith.mulf %49, %49 : vector<40x128xf32>
    %53 = tpu.concatenate %49, %52 in 1 : vector<40x128xf32>, vector<40x128xf32> -> vector<40x256xf32>
    %cst_28 = arith.constant dense<0.000000e+00> : vector<8x256xf32>
    %54 = tpu.matmul %1, %53, %cst_28 {dimension_numbers = #tpu.dot_dimension_numbers<[1], [0], [0], [1], [0, 0, 1, 1], [], []>} : vector<8x40xf32>, vector<40x256xf32>, vector<8x256xf32> -> vector<8x256xf32>
    %cst_29 = arith.constant dense<0.000000e+00> : vector<8x256xf32>
    %55 = tpu.matmul %54, %3, %cst_29 {dimension_numbers = #tpu.dot_dimension_numbers<[1], [0], [0], [1], [0, 0, 1, 1], [], []>} : vector<8x256xf32>, vector<256x256xf32>, vector<8x256xf32> -> vector<8x256xf32>
    %56 = vector.extract_strided_slice %55 {offsets = [0, 0], sizes = [1, 128], strides = [1, 1]} : vector<8x256xf32> to vector<1x128xf32>
    %cst_30 = arith.constant 0.001953125 : f32
    %57 = vector.broadcast %cst_30 : f32 to vector<1x128xf32>
    %58 = arith.mulf %56, %57 : vector<1x128xf32>
    %59 = vector.extract_strided_slice %55 {offsets = [0, 128], sizes = [1, 128], strides = [1, 1]} : vector<8x256xf32> to vector<1x128xf32>
    %cst_31 = arith.constant 0.001953125 : f32
    %60 = vector.broadcast %cst_31 : f32 to vector<1x128xf32>
    %61 = arith.mulf %59, %60 : vector<1x128xf32>
    %62 = arith.mulf %58, %58 : vector<1x128xf32>
    %63 = arith.subf %61, %62 : vector<1x128xf32>
    %cst_32 = arith.constant 9.99999974E-6 : f32
    %64 = vector.broadcast %cst_32 : f32 to vector<1x128xf32>
    %65 = arith.addf %63, %64 : vector<1x128xf32>
    %66 = math.rsqrt %65 : vector<1x128xf32>
    %67 = vector.broadcast %58 : vector<1x128xf32> to vector<40x128xf32>
    %68 = arith.subf %49, %67 : vector<40x128xf32>
    %69 = arith.mulf %66, %50 : vector<1x128xf32>
    %70 = vector.broadcast %69 : vector<1x128xf32> to vector<40x128xf32>
    %71 = arith.mulf %68, %70 : vector<40x128xf32>
    %72 = vector.broadcast %51 : vector<1x128xf32> to vector<40x128xf32>
    %73 = arith.addf %71, %72 : vector<40x128xf32>
    %74 = arith.addf %73, %0 : vector<40x128xf32>
    %cst_33 = arith.constant 0.000000e+00 : f32
    %75 = vector.broadcast %cst_33 : f32 to vector<40x128xf32>
    %76 = arith.maximumf %74, %75 : vector<40x128xf32>
    %c0_34 = arith.constant 0 : index
    %c0_35 = arith.constant 0 : index
    %77 = vector.load %arg10[%c0_34, %c0_35] : memref<40x128xf32, #tpu.memory_space<vmem>>, vector<40x128xf32>
    tpu.vector_store %arg10[%c0_34, %c0_35], %76 {strides = array<i32>} : memref<40x128xf32, #tpu.memory_space<vmem>>, vector<40x128xf32>,
    return
  }
}

</mosaic_0001>

<llo_original>
// kernel: basic_block_forward.1
$region0: #{basic_block_forward.1}
  #allocation0 [shape = 'u32[]', space=smem, size = 0x4, offset = 0x4, fixed_abs, tag = 'smem constant byte address 0x4 - core index']
  #allocation1 [shape = 'u32[72,128]{1,0:T(1,128)}', space=vmem, size = 0x9000, scoped, tag = 'internal scratch']
  %s0 = inlined_call_operand.vmem [shape: f32[40,128], index: 0, kind: input, shape index: {}]
  %s1 = inlined_call_operand.vmem [shape: bf16[384,128], index: 1, kind: input, shape index: {}]
  %s2 = inlined_call_operand.vmem [shape: bf16[384,128], index: 2, kind: input, shape index: {}]
  %s3 = inlined_call_operand.vmem [shape: f32[8,40], index: 3, kind: input, shape index: {}]
  %s4 = inlined_call_operand.vmem [shape: f32[40,1], index: 4, kind: input, shape index: {}]
  %s5 = inlined_call_operand.vmem [shape: f32[256,256], index: 5, kind: input, shape index: {}]
  %s6 = inlined_call_operand.vmem [shape: f32[1,128], index: 6, kind: input, shape index: {}]
  %s7 = inlined_call_operand.vmem [shape: f32[1,128], index: 7, kind: input, shape index: {}]
  %s8 = inlined_call_operand.vmem [shape: f32[1,128], index: 8, kind: input, shape index: {}]
  %s9 = inlined_call_operand.vmem [shape: f32[1,128], index: 9, kind: input, shape index: {}]
  %s10 = inlined_call_operand.vmem [shape: f32[40,128], index: 10, kind: output, shape index: {}]
  %s11 = sld [smem:[#allocation0]]
  $region50: #{basic_block_forward.1} parent=0
    _
  %s13 = ssub.s32 1, %s11
  %s14 = scalar_select 0, %s13, %s11
  // Predicated region
  $region2: #{basic_block_forward.1} parent=0 // pred_check
    _
  $region3: #{basic_block_forward.1} parent=0 // pred_check_branch
    %16 = sbr.rel (0) target = $region5
  $region4: #{basic_block_forward.1} parent=0 // pred_region
    _
  $region5: #{basic_block_forward.1} parent=0 // pred_fallthru
    _
  // Predicated region
  $region6: #{basic_block_forward.1} parent=0 // pred_check
    _
  $region7: #{basic_block_forward.1} parent=0 // pred_check_branch
    %18 = sbr.rel (0) target = $region9
  $region8: #{basic_block_forward.1} parent=0 // pred_region
    _
  $region9: #{basic_block_forward.1} parent=0 // pred_fallthru
    _
  // Predicated region
  $region10: #{basic_block_forward.1} parent=0 // pred_check
    _
  $region11: #{basic_block_forward.1} parent=0 // pred_check_branch
    %20 = sbr.rel (0) target = $region13
  $region12: #{basic_block_forward.1} parent=0 // pred_region
    _
  $region13: #{basic_block_forward.1} parent=0 // pred_fallthru
    _
  // Predicated region
  $region14: #{basic_block_forward.1} parent=0 // pred_check
    _
  $region15: #{basic_block_forward.1} parent=0 // pred_check_branch
    %22 = sbr.rel (0) target = $region17
  $region16: #{basic_block_forward.1} parent=0 // pred_region
    _
  $region17: #{basic_block_forward.1} parent=0 // pred_fallthru
    _
  // Predicated region
  $region18: #{basic_block_forward.1} parent=0 // pred_check
    _
  $region19: #{basic_block_forward.1} parent=0 // pred_check_branch
    %24 = sbr.rel (0) target = $region21
  $region20: #{basic_block_forward.1} parent=0 // pred_region
    _
  $region21: #{basic_block_forward.1} parent=0 // pred_fallthru
    _
  // Predicated region
  $region22: #{basic_block_forward.1} parent=0 // pred_check
    _
  $region23: #{basic_block_forward.1} parent=0 // pred_check_branch
    %26 = sbr.rel (0) target = $region25
  $region24: #{basic_block_forward.1} parent=0 // pred_region
    _
  $region25: #{basic_block_forward.1} parent=0 // pred_fallthru
    _
  // Predicated region
  $region26: #{basic_block_forward.1} parent=0 // pred_check
    _
  $region27: #{basic_block_forward.1} parent=0 // pred_check_branch
    %28 = sbr.rel (0) target = $region29
  $region28: #{basic_block_forward.1} parent=0 // pred_region
    _
  $region29: #{basic_block_forward.1} parent=0 // pred_fallthru
    _
  // Predicated region
  $region30: #{basic_block_forward.1} parent=0 // pred_check
    _
  $region31: #{basic_block_forward.1} parent=0 // pred_check_branch
    %30 = sbr.rel (0) target = $region33
  $region32: #{basic_block_forward.1} parent=0 // pred_region
    _
  $region33: #{basic_block_forward.1} parent=0 // pred_fallthru
    _
  // Predicated region
  $region34: #{basic_block_forward.1} parent=0 // pred_check
    _
  $region35: #{basic_block_forward.1} parent=0 // pred_check_branch
    %32 = sbr.rel (0) target = $region37
  $region36: #{basic_block_forward.1} parent=0 // pred_region
    _
  $region37: #{basic_block_forward.1} parent=0 // pred_fallthru
    _
  // Predicated region
  $region38: #{basic_block_forward.1} parent=0 // pred_check
    _
  $region39: #{basic_block_forward.1} parent=0 // pred_check_branch
    %34 = sbr.rel (0) target = $region41
  $region40: #{basic_block_forward.1} parent=0 // pred_region
    _
  $region41: #{basic_block_forward.1} parent=0 // pred_fallthru
    _
  %v35 = vld [vmem:[%s0] sm:$0xff]
  %v36 = vld [vmem:[%s0 + $0x8] sm:$0xff]
  %v37 = vld [vmem:[%s0 + $0x10] sm:$0xff]
  %v38 = vld [vmem:[%s0 + $0x18] sm:$0xff]
  %v39 = vld [vmem:[%s0 + $0x20] sm:$0xff]
  %v40 = vld [vmem:[%s3] sm:$0xff]
  %v41 = vld [vmem:[%s4] sm:$0xff]
  %v42 = vld [vmem:[%s4 + $0x8] sm:$0xff]
  %v43 = vld [vmem:[%s4 + $0x10] sm:$0xff]
  %v44 = vld [vmem:[%s4 + $0x18] sm:$0xff]
  %v45 = vld [vmem:[%s4 + $0x20] sm:$0xff]
  %v46 = vld [vmem:[%s5] sm:$0xff]
  %v47 = vld [vmem:[%s5 + $0x8] sm:$0xff]
  %v48 = vld [vmem:[%s5 + $0x10] sm:$0xff]
  %v49 = vld [vmem:[%s5 + $0x18] sm:$0xff]
  %v50 = vld [vmem:[%s5 + $0x20] sm:$0xff]
  %v51 = vld [vmem:[%s5 + $0x28] sm:$0xff]
  %v52 = vld [vmem:[%s5 + $0x30] sm:$0xff]
  %v53 = vld [vmem:[%s5 + $0x38] sm:$0xff]
  %v54 = vld [vmem:[%s5 + $0x40] sm:$0xff]
  %v55 = vld [vmem:[%s5 + $0x48] sm:$0xff]
  %v56 = vld [vmem:[%s5 + $0x50] sm:$0xff]
  %v57 = vld [vmem:[%s5 + $0x58] sm:$0xff]
  %v58 = vld [vmem:[%s5 + $0x60] sm:$0xff]
  %v59 = vld [vmem:[%s5 + $0x68] sm:$0xff]
  %v60 = vld [vmem:[%s5 + $0x70] sm:$0xff]
  %v61 = vld [vmem:[%s5 + $0x78] sm:$0xff]
  %v62 = vld [vmem:[%s5 + $0x80] sm:$0xff]
  %v63 = vld [vmem:[%s5 + $0x88] sm:$0xff]
  %v64 = vld [vmem:[%s5 + $0x90] sm:$0xff]
  %v65 = vld [vmem:[%s5 + $0x98] sm:$0xff]
  %v66 = vld [vmem:[%s5 + $0xa0] sm:$0xff]
  %v67 = vld [vmem:[%s5 + $0xa8] sm:$0xff]
  %v68 = vld [vmem:[%s5 + $0xb0] sm:$0xff]
  %v69 = vld [vmem:[%s5 + $0xb8] sm:$0xff]
  %v70 = vld [vmem:[%s5 + $0xc0] sm:$0xff]
  %v71 = vld [vmem:[%s5 + $0xc8] sm:$0xff]
  %v72 = vld [vmem:[%s5 + $0xd0] sm:$0xff]
  %v73 = vld [vmem:[%s5 + $0xd8] sm:$0xff]
  %v74 = vld [vmem:[%s5 + $0xe0] sm:$0xff]
  %v75 = vld [vmem:[%s5 + $0xe8] sm:$0xff]
  %v76 = vld [vmem:[%s5 + $0xf0] sm:$0xff]
  %v77 = vld [vmem:[%s5 + $0xf8] sm:$0xff]
  %v78 = vld [vmem:[%s5 + $0x100] sm:$0xff]
  %v79 = vld [vmem:[%s5 + $0x108] sm:$0xff]
  %v80 = vld [vmem:[%s5 + $0x110] sm:$0xff]
  %v81 = vld [vmem:[%s5 + $0x118] sm:$0xff]
  %v82 = vld [vmem:[%s5 + $0x120] sm:$0xff]
  %v83 = vld [vmem:[%s5 + $0x128] sm:$0xff]
  %v84 = vld [vmem:[%s5 + $0x130] sm:$0xff]
  %v85 = vld [vmem:[%s5 + $0x138] sm:$0xff]
  %v86 = vld [vmem:[%s5 + $0x140] sm:$0xff]
  %v87 = vld [vmem:[%s5 + $0x148] sm:$0xff]
  %v88 = vld [vmem:[%s5 + $0x150] sm:$0xff]
  %v89 = vld [vmem:[%s5 + $0x158] sm:$0xff]
  %v90 = vld [vmem:[%s5 + $0x160] sm:$0xff]
  %v91 = vld [vmem:[%s5 + $0x168] sm:$0xff]
  %v92 = vld [vmem:[%s5 + $0x170] sm:$0xff]
  %v93 = vld [vmem:[%s5 + $0x178] sm:$0xff]
  %v94 = vld [vmem:[%s5 + $0x180] sm:$0xff]
  %v95 = vld [vmem:[%s5 + $0x188] sm:$0xff]
  %v96 = vld [vmem:[%s5 + $0x190] sm:$0xff]
  %v97 = vld [vmem:[%s5 + $0x198] sm:$0xff]
  %v98 = vld [vmem:[%s5 + $0x1a0] sm:$0xff]
  %v99 = vld [vmem:[%s5 + $0x1a8] sm:$0xff]
  %v100 = vld [vmem:[%s5 + $0x1b0] sm:$0xff]
  %v101 = vld [vmem:[%s5 + $0x1b8] sm:$0xff]
  %v102 = vld [vmem:[%s5 + $0x1c0] sm:$0xff]
  %v103 = vld [vmem:[%s5 + $0x1c8] sm:$0xff]
  %v104 = vld [vmem:[%s5 + $0x1d0] sm:$0xff]
  %v105 = vld [vmem:[%s5 + $0x1d8] sm:$0xff]
  %v106 = vld [vmem:[%s5 + $0x1e0] sm:$0xff]
  %v107 = vld [vmem:[%s5 + $0x1e8] sm:$0xff]
  %v108 = vld [vmem:[%s5 + $0x1f0] sm:$0xff]
  %v109 = vld [vmem:[%s5 + $0x1f8] sm:$0xff]
  %vm115 = vcmask 1040384
  %v116 = vrot.slane %v35, 7
  %v117 = vrot.slane %v36, 7
  %v118 = vsel %vm115, %v116, %v117
  %v119 = vrot.slane %v37, 7
  %v120 = vsel %vm115, %v117, %v119
  %v121 = vrot.slane %v38, 7
  %v122 = vsel %vm115, %v119, %v121
  %v123 = vrot.slane %v39, 7
  %v124 = vsel %vm115, %v121, %v123
  %v130 = vsel %vm115, 0.0, %v116
  %vm131 = vcmask 1046528
  %v132 = vrot.slane %v35, 1
  %v133 = vrot.slane %v36, 1
  %v134 = vsel %vm131, %v132, %v133
  %v135 = vrot.slane %v37, 1
  %v136 = vsel %vm131, %v133, %v135
  %v137 = vrot.slane %v38, 1
  %v138 = vsel %vm131, %v135, %v137
  %v139 = vrot.slane %v39, 1
  %v140 = vsel %vm131, %v137, %v139
  %v146 = vsel %vm131, %v139, 0.0
  %v147 = vpack.c.bf16 %v118, %v130
  %v148 = vpack.c.bf16 %v36, %v35
  %v149 = vpack.c.bf16 %v136, %v134
  %v150 = vpack.c.bf16 %v122, %v120
  %v151 = vpack.c.bf16 %v38, %v37
  %v152 = vpack.c.bf16 %v140, %v138
  %v153 = vpack.c.bf16 %v124, %v124
  %v154 = vpack.c.bf16 %v39, %v39
  %v155 = vpack.c.bf16 %v146, %v146
  %v156 = vld [vmem:[%s1] sm:$0xf]
  %v157 = vld [vmem:[%s1 + $0x4] sm:$0xf]
  %v158 = vld [vmem:[%s1 + $0x8] sm:$0xf]
  %v159 = vld [vmem:[%s1 + $0xc] sm:$0xf]
  %v160 = vld [vmem:[%s1 + $0x10] sm:$0xf]
  %v161 = vld [vmem:[%s1 + $0x14] sm:$0xf]
  %v162 = vld [vmem:[%s1 + $0x18] sm:$0xf]
  %v163 = vld [vmem:[%s1 + $0x1c] sm:$0xf]
  %v164 = vld [vmem:[%s1 + $0x20] sm:$0xf]
  %v165 = vld [vmem:[%s1 + $0x24] sm:$0xf]
  %v166 = vld [vmem:[%s1 + $0x28] sm:$0xf]
  %v167 = vld [vmem:[%s1 + $0x2c] sm:$0xf]
  %v168 = vld [vmem:[%s1 + $0x30] sm:$0xf]
  %v169 = vld [vmem:[%s1 + $0x34] sm:$0xf]
  %v170 = vld [vmem:[%s1 + $0x38] sm:$0xf]
  %v171 = vld [vmem:[%s1 + $0x3c] sm:$0xf]
  %v172 = vld [vmem:[%s1 + $0x40] sm:$0xf]
  %v173 = vld [vmem:[%s1 + $0x44] sm:$0xf]
  %v174 = vld [vmem:[%s1 + $0x48] sm:$0xf]
  %v175 = vld [vmem:[%s1 + $0x4c] sm:$0xf]
  %v176 = vld [vmem:[%s1 + $0x50] sm:$0xf]
  %v177 = vld [vmem:[%s1 + $0x54] sm:$0xf]
  %v178 = vld [vmem:[%s1 + $0x58] sm:$0xf]
  %v179 = vld [vmem:[%s1 + $0x5c] sm:$0xf]
  %v180 = vld [vmem:[%s1 + $0x60] sm:$0xf]
  %v181 = vld [vmem:[%s1 + $0x64] sm:$0xf]
  %v182 = vld [vmem:[%s1 + $0x68] sm:$0xf]
  %v183 = vld [vmem:[%s1 + $0x6c] sm:$0xf]
  %v184 = vld [vmem:[%s1 + $0x70] sm:$0xf]
  %v185 = vld [vmem:[%s1 + $0x74] sm:$0xf]
  %v186 = vld [vmem:[%s1 + $0x78] sm:$0xf]
  %v187 = vld [vmem:[%s1 + $0x7c] sm:$0xf]
  %v188 = vld [vmem:[%s1 + $0x80] sm:$0xf]
  %v189 = vld [vmem:[%s1 + $0x84] sm:$0xf]
  %v190 = vld [vmem:[%s1 + $0x88] sm:$0xf]
  %v191 = vld [vmem:[%s1 + $0x8c] sm:$0xf]
  %v192 = vld [vmem:[%s1 + $0x90] sm:$0xf]
  %v193 = vld [vmem:[%s1 + $0x94] sm:$0xf]
  %v194 = vld [vmem:[%s1 + $0x98] sm:$0xf]
  %v195 = vld [vmem:[%s1 + $0x9c] sm:$0xf]
  %v196 = vld [vmem:[%s1 + $0xa0] sm:$0xf]
  %v197 = vld [vmem:[%s1 + $0xa4] sm:$0xf]
  %v198 = vld [vmem:[%s1 + $0xa8] sm:$0xf]
  %v199 = vld [vmem:[%s1 + $0xac] sm:$0xf]
  %v200 = vld [vmem:[%s1 + $0xb0] sm:$0xf]
  %v201 = vld [vmem:[%s1 + $0xb4] sm:$0xf]
  %v202 = vld [vmem:[%s1 + $0xb8] sm:$0xf]
  %v203 = vld [vmem:[%s1 + $0xbc] sm:$0xf]
  %v252 = vunpack.c.l.b16 %v156
  %v253 = vunpack.c.l.b16 %v157
  %v254 = vunpack.c.l.b16 %v158
  %v255 = vunpack.c.l.b16 %v159
  %v256 = vunpack.c.l.b16 %v160
  %v257 = vunpack.c.l.b16 %v161
  %v258 = vunpack.c.l.b16 %v162
  %v259 = vunpack.c.l.b16 %v163
  %v260 = vunpack.c.l.b16 %v164
  %v261 = vunpack.c.l.b16 %v165
  %v262 = vunpack.c.l.b16 %v166
  %v263 = vunpack.c.l.b16 %v167
  %v264 = vunpack.c.l.b16 %v168
  %v265 = vunpack.c.l.b16 %v169
  %v266 = vunpack.c.l.b16 %v170
  %v267 = vunpack.c.l.b16 %v171
  %v268 = vunpack.c.l.b16 %v172
  %v269 = vunpack.c.l.b16 %v173
  %v270 = vunpack.c.l.b16 %v174
  %v271 = vunpack.c.l.b16 %v175
  %v272 = vunpack.c.l.b16 %v176
  %v273 = vunpack.c.l.b16 %v177
  %v274 = vunpack.c.l.b16 %v178
  %v275 = vunpack.c.l.b16 %v179
  %v276 = vunpack.c.l.b16 %v180
  %v277 = vunpack.c.l.b16 %v181
  %v278 = vunpack.c.l.b16 %v182
  %v279 = vunpack.c.l.b16 %v183
  %v280 = vunpack.c.l.b16 %v184
  %v281 = vunpack.c.l.b16 %v185
  %v282 = vunpack.c.l.b16 %v186
  %v283 = vunpack.c.l.b16 %v187
  %v284 = vunpack.c.l.b16 %v188
  %v285 = vunpack.c.l.b16 %v189
  %v286 = vunpack.c.l.b16 %v190
  %v287 = vunpack.c.l.b16 %v191
  %v288 = vunpack.c.l.b16 %v192
  %v289 = vunpack.c.l.b16 %v193
  %v290 = vunpack.c.l.b16 %v194
  %v291 = vunpack.c.l.b16 %v195
  %v292 = vunpack.c.l.b16 %v196
  %v293 = vunpack.c.l.b16 %v197
  %v294 = vunpack.c.l.b16 %v198
  %v295 = vunpack.c.l.b16 %v199
  %v296 = vunpack.c.l.b16 %v200
  %v297 = vunpack.c.l.b16 %v201
  %v298 = vunpack.c.l.b16 %v202
  %v299 = vunpack.c.l.b16 %v203
  %v300 = vpack.c.b16 %v253, %v252
  %v301 = vpack.c.b16 %v255, %v254
  %v302 = vpack.c.b16 %v257, %v256
  %v303 = vpack.c.b16 %v259, %v258
  %v304 = vpack.c.b16 %v261, %v260
  %v305 = vpack.c.b16 %v263, %v262
  %v306 = vpack.c.b16 %v265, %v264
  %v307 = vpack.c.b16 %v267, %v266
  %v308 = vpack.c.b16 %v269, %v268
  %v309 = vpack.c.b16 %v271, %v270
  %v310 = vpack.c.b16 %v273, %v272
  %v311 = vpack.c.b16 %v275, %v274
  %v312 = vpack.c.b16 %v277, %v276
  %v313 = vpack.c.b16 %v279, %v278
  %v314 = vpack.c.b16 %v281, %v280
  %v315 = vpack.c.b16 %v283, %v282
  %v316 = vpack.c.b16 %v285, %v284
  %v317 = vpack.c.b16 %v287, %v286
  %v318 = vpack.c.b16 %v289, %v288
  %v319 = vpack.c.b16 %v291, %v290
  %v320 = vpack.c.b16 %v293, %v292
  %v321 = vpack.c.b16 %v295, %v294
  %v322 = vpack.c.b16 %v297, %v296
  %v323 = vpack.c.b16 %v299, %v298
  %348 = vmatpush.bf16.msra.mxu0 %v307
  %349 = vmatpush.bf16.msra.mxu0 %v306
  %350 = vmatpush.bf16.msra.mxu0 %v305
  %351 = vmatpush.bf16.msra.mxu0 %v304
  %352 = vmatpush.bf16.msra.mxu0 %v303
  %353 = vmatpush.bf16.msra.mxu0 %v302
  %354 = vmatpush.bf16.msra.mxu0 %v301
  %355 = vmatpush.bf16.msra.mxu0 %v300
  %356 = vmatmul.bf16.gmra.mxu0 %v147
  %v357 = vpop.f32.mrf.mxu0
  %v358 = vadd.f32 0.0, %v357
  %v359 = vpop.f32.mrf.mxu0
  %v360 = vadd.f32 0.0, %v359
  %361 = vmatmul.bf16.gmra.mxu0 %v150
  %v362 = vpop.f32.mrf.mxu0
  %v363 = vadd.f32 0.0, %v362
  %v364 = vpop.f32.mrf.mxu0
  %v365 = vadd.f32 0.0, %v364
  %366 = vmatmul.bf16.gmra.mxu0 %v153
  %v367 = vpop.f32.mrf.mxu0
  %v368 = vadd.f32 0.0, %v367
  %v369 = vpop.f32.mrf.mxu0
  %370 = vdwg.mxu0
  %371 = vmatpush.bf16.msra.mxu0 %v315
  %372 = vmatpush.bf16.msra.mxu0 %v314
  %373 = vmatpush.bf16.msra.mxu0 %v313
  %374 = vmatpush.bf16.msra.mxu0 %v312
  %375 = vmatpush.bf16.msra.mxu0 %v311
  %376 = vmatpush.bf16.msra.mxu0 %v310
  %377 = vmatpush.bf16.msra.mxu0 %v309
  %378 = vmatpush.bf16.msra.mxu0 %v308
  %379 = vmatmul.bf16.gmra.mxu0 %v148
  %v380 = vpop.f32.mrf.mxu0
  %v381 = vadd.f32 %v358, %v380
  %v382 = vpop.f32.mrf.mxu0
  %v383 = vadd.f32 %v360, %v382
  %384 = vmatmul.bf16.gmra.mxu0 %v151
  %v385 = vpop.f32.mrf.mxu0
  %v386 = vadd.f32 %v363, %v385
  %v387 = vpop.f32.mrf.mxu0
  %v388 = vadd.f32 %v365, %v387
  %389 = vmatmul.bf16.gmra.mxu0 %v154
  %v390 = vpop.f32.mrf.mxu0
  %v391 = vadd.f32 %v368, %v390
  %v392 = vpop.f32.mrf.mxu0
  %393 = vdwg.mxu0
  %394 = vmatpush.bf16.msra.mxu0 %v323
  %395 = vmatpush.bf16.msra.mxu0 %v322
  %396 = vmatpush.bf16.msra.mxu0 %v321
  %397 = vmatpush.bf16.msra.mxu0 %v320
  %398 = vmatpush.bf16.msra.mxu0 %v319
  %399 = vmatpush.bf16.msra.mxu0 %v318
  %400 = vmatpush.bf16.msra.mxu0 %v317
  %401 = vmatpush.bf16.msra.mxu0 %v316
  %402 = vmatmul.bf16.gmra.mxu0 %v149
  %v403 = vpop.f32.mrf.mxu0
  %v404 = vadd.f32 %v381, %v403
  %v405 = vpop.f32.mrf.mxu0
  %v406 = vadd.f32 %v383, %v405
  %407 = vmatmul.bf16.gmra.mxu0 %v152
  %v408 = vpop.f32.mrf.mxu0
  %v409 = vadd.f32 %v386, %v408
  %v410 = vpop.f32.mrf.mxu0
  %v411 = vadd.f32 %v388, %v410
  %412 = vmatmul.bf16.gmra.mxu0 %v155
  %v413 = vpop.f32.mrf.mxu0
  %v414 = vadd.f32 %v391, %v413
  %v415 = vpop.f32.mrf.mxu0
  %416 = vdwg.mxu0
  %v417 = vld [vmem:[%s6] sm:$0x1]
  %v418 = vld [vmem:[%s7] sm:$0x1]
  %v419 = vmul.f32 %v404, %v404
  %v420 = vmul.f32 %v406, %v406
  %v421 = vmul.f32 %v409, %v409
  %v422 = vmul.f32 %v411, %v411
  %v423 = vmul.f32 %v414, %v414
  %vm424 = vcmask 326656
  %v426 = vsel %vm424, %v40, 0
  %428 = vmatpush.msra.mxu0 0.0
  %429 = vmatpush.msra.mxu0 0.0
  %430 = vmatpush.msra.mxu0 0.0
  %431 = vmatpush.msra.mxu0 0.0
  %432 = vmatpush.msra.mxu0 0.0
  %433 = vmatpush.msra.mxu0 0.0
  %434 = vmatpush.msra.mxu0 0.0
  %435 = vmatpush.msra.mxu0 0.0
  %436 = vmatpush.msra.mxu0 0.0
  %437 = vmatpush.msra.mxu0 0.0
  %438 = vmatpush.msra.mxu0 0.0
  %439 = vmatpush.msra.mxu0 %v414
  %440 = vmatpush.msra.mxu0 %v411
  %441 = vmatpush.msra.mxu0 %v409
  %442 = vmatpush.msra.mxu0 %v406
  %443 = vmatpush.msra.mxu0 %v404
  %444 = vmatmul.f32.gmra.mxu0 %v426
  %v445 = vpop.f32.mrf.mxu0
  %v446 = vadd.f32 0.0, %v445
  %447 = vdwg.mxu0
  %448 = vmatpush.msra.mxu0 0.0
  %449 = vmatpush.msra.mxu0 0.0
  %450 = vmatpush.msra.mxu0 0.0
  %451 = vmatpush.msra.mxu0 0.0
  %452 = vmatpush.msra.mxu0 0.0
  %453 = vmatpush.msra.mxu0 0.0
  %454 = vmatpush.msra.mxu0 0.0
  %455 = vmatpush.msra.mxu0 0.0
  %456 = vmatpush.msra.mxu0 0.0
  %457 = vmatpush.msra.mxu0 0.0
  %458 = vmatpush.msra.mxu0 0.0
  %459 = vmatpush.msra.mxu0 %v423
  %460 = vmatpush.msra.mxu0 %v422
  %461 = vmatpush.msra.mxu0 %v421
  %462 = vmatpush.msra.mxu0 %v420
  %463 = vmatpush.msra.mxu0 %v419
  %464 = vmatmul.f32.gmra.mxu0 %v426
  %v465 = vpop.f32.mrf.mxu0
  %v466 = vadd.f32 0.0, %v465
  %467 = vdwg.mxu0
  %468 = vmatpush.msra.mxu0 %v76
  %469 = vmatpush.msra.mxu0 %v74
  %470 = vmatpush.msra.mxu0 %v72
  %471 = vmatpush.msra.mxu0 %v70
  %472 = vmatpush.msra.mxu0 %v68
  %473 = vmatpush.msra.mxu0 %v66
  %474 = vmatpush.msra.mxu0 %v64
  %475 = vmatpush.msra.mxu0 %v62
  %476 = vmatpush.msra.mxu0 %v60
  %477 = vmatpush.msra.mxu0 %v58
  %478 = vmatpush.msra.mxu0 %v56
  %479 = vmatpush.msra.mxu0 %v54
  %480 = vmatpush.msra.mxu0 %v52
  %481 = vmatpush.msra.mxu0 %v50
  %482 = vmatpush.msra.mxu0 %v48
  %483 = vmatpush.msra.mxu0 %v46
  %484 = vmatmul.f32.gmra.mxu0 %v446
  %v485 = vpop.f32.mrf.mxu0
  %v486 = vadd.f32 0.0, %v485
  %487 = vdwg.mxu0
  %488 = vmatpush.msra.mxu0 %v108
  %489 = vmatpush.msra.mxu0 %v106
  %490 = vmatpush.msra.mxu0 %v104
  %491 = vmatpush.msra.mxu0 %v102
  %492 = vmatpush.msra.mxu0 %v100
  %493 = vmatpush.msra.mxu0 %v98
  %494 = vmatpush.msra.mxu0 %v96
  %495 = vmatpush.msra.mxu0 %v94
  %496 = vmatpush.msra.mxu0 %v92
  %497 = vmatpush.msra.mxu0 %v90
  %498 = vmatpush.msra.mxu0 %v88
  %499 = vmatpush.msra.mxu0 %v86
  %500 = vmatpush.msra.mxu0 %v84
  %501 = vmatpush.msra.mxu0 %v82
  %502 = vmatpush.msra.mxu0 %v80
  %503 = vmatpush.msra.mxu0 %v78
  %504 = vmatmul.f32.gmra.mxu0 %v466
  %v505 = vpop.f32.mrf.mxu0
  %v506 = vadd.f32 %v486, %v505
  %507 = vdwg.mxu0
  %508 = vmatpush.msra.mxu0 %v77
  %509 = vmatpush.msra.mxu0 %v75
  %510 = vmatpush.msra.mxu0 %v73
  %511 = vmatpush.msra.mxu0 %v71
  %512 = vmatpush.msra.mxu0 %v69
  %513 = vmatpush.msra.mxu0 %v67
  %514 = vmatpush.msra.mxu0 %v65
  %515 = vmatpush.msra.mxu0 %v63
  %516 = vmatpush.msra.mxu0 %v61
  %517 = vmatpush.msra.mxu0 %v59
  %518 = vmatpush.msra.mxu0 %v57
  %519 = vmatpush.msra.mxu0 %v55
  %520 = vmatpush.msra.mxu0 %v53
  %521 = vmatpush.msra.mxu0 %v51
  %522 = vmatpush.msra.mxu0 %v49
  %523 = vmatpush.msra.mxu0 %v47
  %524 = vmatmul.f32.gmra.mxu0 %v446
  %v525 = vpop.f32.mrf.mxu0
  %v526 = vadd.f32 0.0, %v525
  %527 = vdwg.mxu0
  %528 = vmatpush.msra.mxu0 %v109
  %529 = vmatpush.msra.mxu0 %v107
  %530 = vmatpush.msra.mxu0 %v105
  %531 = vmatpush.msra.mxu0 %v103
  %532 = vmatpush.msra.mxu0 %v101
  %533 = vmatpush.msra.mxu0 %v99
  %534 = vmatpush.msra.mxu0 %v97
  %535 = vmatpush.msra.mxu0 %v95
  %536 = vmatpush.msra.mxu0 %v93
  %537 = vmatpush.msra.mxu0 %v91
  %538 = vmatpush.msra.mxu0 %v89
  %539 = vmatpush.msra.mxu0 %v87
  %540 = vmatpush.msra.mxu0 %v85
  %541 = vmatpush.msra.mxu0 %v83
  %542 = vmatpush.msra.mxu0 %v81
  %543 = vmatpush.msra.mxu0 %v79
  %544 = vmatmul.f32.gmra.mxu0 %v466
  %v545 = vpop.f32.mrf.mxu0
  %v546 = vadd.f32 %v526, %v545
  %547 = vdwg.mxu0
  %v548 = vmul.f32 %v506, 0.001953125
  %v549 = vmul.f32 %v546, 0.001953125
  %v550 = vmul.f32 %v548, %v548
  %v551 = vsub.f32 %v549, %v550
  %v552 = vadd.f32 %v551, 1e-05
  %v553 = vrsqrt.pop %v552
  %v554 = vmul.f32 %v553, %v552
  %v555 = vmul.f32 %v554, %v553
  %v556 = vmul.f32 0.5, %v555
  %v557 = vsub.f32 1.5, %v556
  %v558 = vmul.f32 %v553, %v557
  %vm559 = vweird.f32 %v552
  %vm560 = vweird.f32 %v553
  %vm561 = vmor %vm559, %vm560
  %v562 = vsel %vm561, %v553, %v558
  %v563 = vperm.slane %v548, 0
  %v564 = vsub.f32 %v404, %v563
  %v565 = vsub.f32 %v406, %v563
  %v566 = vsub.f32 %v409, %v563
  %v567 = vsub.f32 %v411, %v563
  %v568 = vsub.f32 %v414, %v563
  %v569 = vmul.f32 %v562, %v417
  %v570 = vperm.slane %v569, 0
  %v571 = vmul.f32 %v564, %v570
  %v572 = vmul.f32 %v565, %v570
  %v573 = vmul.f32 %v566, %v570
  %v574 = vmul.f32 %v567, %v570
  %v575 = vmul.f32 %v568, %v570
  %v577 = vperm.slane %v418, 0
  %v579 = vadd.f32 %v571, %v577
  %v580 = vadd.f32 %v572, %v577
  %v581 = vadd.f32 %v573, %v577
  %v582 = vadd.f32 %v574, %v577
  %v583 = vadd.f32 %v575, %v577
  %v584 = vmax.f32 %v579, 0.0
  %v585 = vmax.f32 %v580, 0.0
  %v586 = vmax.f32 %v581, 0.0
  %v587 = vmax.f32 %v582, 0.0
  %v588 = vmax.f32 %v583, 0.0
  %590 = vset.pattern.permute.xlu0 0
  %591 = vperm.xlu0 %590, %v41
  %v592 = vpop.permute.xlu0 %591
  %595 = vset.pattern.permute.xlu0 0
  %596 = vperm.xlu0 %595, %v42
  %v597 = vpop.permute.xlu0 %596
  %600 = vset.pattern.permute.xlu0 0
  %601 = vperm.xlu0 %600, %v43
  %v602 = vpop.permute.xlu0 %601
  %605 = vset.pattern.permute.xlu0 0
  %606 = vperm.xlu0 %605, %v44
  %v607 = vpop.permute.xlu0 %606
  %610 = vset.pattern.permute.xlu0 0
  %611 = vperm.xlu0 %610, %v45
  %v612 = vpop.permute.xlu0 %611
  %v614 = vmul.f32 %v584, %v592
  %v615 = vmul.f32 %v585, %v597
  %v616 = vmul.f32 %v586, %v602
  %v617 = vmul.f32 %v587, %v607
  %v618 = vmul.f32 %v588, %v612
  %v624 = vrot.slane %v614, 7
  %v625 = vrot.slane %v615, 7
  %v626 = vsel %vm115, %v624, %v625
  %v627 = vrot.slane %v616, 7
  %v628 = vsel %vm115, %v625, %v627
  %v629 = vrot.slane %v617, 7
  %v630 = vsel %vm115, %v627, %v629
  %v631 = vrot.slane %v618, 7
  %v632 = vsel %vm115, %v629, %v631
  %v638 = vsel %vm115, 0.0, %v624
  %v639 = vrot.slane %v614, 1
  %v640 = vrot.slane %v615, 1
  %v641 = vsel %vm131, %v639, %v640
  %v642 = vrot.slane %v616, 1
  %v643 = vsel %vm131, %v640, %v642
  %v644 = vrot.slane %v617, 1
  %v645 = vsel %vm131, %v642, %v644
  %v646 = vrot.slane %v618, 1
  %v647 = vsel %vm131, %v644, %v646
  %v653 = vsel %vm131, %v646, 0.0
  %v654 = vpack.c.bf16 %v626, %v638
  %v655 = vpack.c.bf16 %v615, %v614
  %v656 = vpack.c.bf16 %v643, %v641
  %v657 = vpack.c.bf16 %v630, %v628
  %v658 = vpack.c.bf16 %v617, %v616
  %v659 = vpack.c.bf16 %v647, %v645
  %v660 = vpack.c.bf16 %v632, %v632
  %v661 = vpack.c.bf16 %v618, %v618
  %v662 = vpack.c.bf16 %v653, %v653
  %v663 = vld [vmem:[%s2] sm:$0xf]
  %v664 = vld [vmem:[%s2 + $0x4] sm:$0xf]
  %v665 = vld [vmem:[%s2 + $0x8] sm:$0xf]
  %v666 = vld [vmem:[%s2 + $0xc] sm:$0xf]
  %v667 = vld [vmem:[%s2 + $0x10] sm:$0xf]
  %v668 = vld [vmem:[%s2 + $0x14] sm:$0xf]
  %v669 = vld [vmem:[%s2 + $0x18] sm:$0xf]
  %v670 = vld [vmem:[%s2 + $0x1c] sm:$0xf]
  %v671 = vld [vmem:[%s2 + $0x20] sm:$0xf]
  %v672 = vld [vmem:[%s2 + $0x24] sm:$0xf]
  %v673 = vld [vmem:[%s2 + $0x28] sm:$0xf]
  %v674 = vld [vmem:[%s2 + $0x2c] sm:$0xf]
  %v675 = vld [vmem:[%s2 + $0x30] sm:$0xf]
  %v676 = vld [vmem:[%s2 + $0x34] sm:$0xf]
  %v677 = vld [vmem:[%s2 + $0x38] sm:$0xf]
  %v678 = vld [vmem:[%s2 + $0x3c] sm:$0xf]
  %v679 = vld [vmem:[%s2 + $0x40] sm:$0xf]
  %v680 = vld [vmem:[%s2 + $0x44] sm:$0xf]
  %v681 = vld [vmem:[%s2 + $0x48] sm:$0xf]
  %v682 = vld [vmem:[%s2 + $0x4c] sm:$0xf]
  %v683 = vld [vmem:[%s2 + $0x50] sm:$0xf]
  %v684 = vld [vmem:[%s2 + $0x54] sm:$0xf]
  %v685 = vld [vmem:[%s2 + $0x58] sm:$0xf]
  %v686 = vld [vmem:[%s2 + $0x5c] sm:$0xf]
  %v687 = vld [vmem:[%s2 + $0x60] sm:$0xf]
  %v688 = vld [vmem:[%s2 + $0x64] sm:$0xf]
  %v689 = vld [vmem:[%s2 + $0x68] sm:$0xf]
  %v690 = vld [vmem:[%s2 + $0x6c] sm:$0xf]
  %v691 = vld [vmem:[%s2 + $0x70] sm:$0xf]
  %v692 = vld [vmem:[%s2 + $0x74] sm:$0xf]
  %v693 = vld [vmem:[%s2 + $0x78] sm:$0xf]
  %v694 = vld [vmem:[%s2 + $0x7c] sm:$0xf]
  %v695 = vld [vmem:[%s2 + $0x80] sm:$0xf]
  %v696 = vld [vmem:[%s2 + $0x84] sm:$0xf]
  %v697 = vld [vmem:[%s2 + $0x88] sm:$0xf]
  %v698 = vld [vmem:[%s2 + $0x8c] sm:$0xf]
  %v699 = vld [vmem:[%s2 + $0x90] sm:$0xf]
  %v700 = vld [vmem:[%s2 + $0x94] sm:$0xf]
  %v701 = vld [vmem:[%s2 + $0x98] sm:$0xf]
  %v702 = vld [vmem:[%s2 + $0x9c] sm:$0xf]
  %v703 = vld [vmem:[%s2 + $0xa0] sm:$0xf]
  %v704 = vld [vmem:[%s2 + $0xa4] sm:$0xf]
  %v705 = vld [vmem:[%s2 + $0xa8] sm:$0xf]
  %v706 = vld [vmem:[%s2 + $0xac] sm:$0xf]
  %v707 = vld [vmem:[%s2 + $0xb0] sm:$0xf]
  %v708 = vld [vmem:[%s2 + $0xb4] sm:$0xf]
  %v709 = vld [vmem:[%s2 + $0xb8] sm:$0xf]
  %v710 = vld [vmem:[%s2 + $0xbc] sm:$0xf]
  %v759 = vunpack.c.l.b16 %v663
  %v760 = vunpack.c.l.b16 %v664
  %v761 = vunpack.c.l.b16 %v665
  %v762 = vunpack.c.l.b16 %v666
  %v763 = vunpack.c.l.b16 %v667
  %v764 = vunpack.c.l.b16 %v668
  %v765 = vunpack.c.l.b16 %v669
  %v766 = vunpack.c.l.b16 %v670
  %v767 = vunpack.c.l.b16 %v671
  %v768 = vunpack.c.l.b16 %v672
  %v769 = vunpack.c.l.b16 %v673
  %v770 = vunpack.c.l.b16 %v674
  %v771 = vunpack.c.l.b16 %v675
  %v772 = vunpack.c.l.b16 %v676
  %v773 = vunpack.c.l.b16 %v677
  %v774 = vunpack.c.l.b16 %v678
  %v775 = vunpack.c.l.b16 %v679
  %v776 = vunpack.c.l.b16 %v680
  %v777 = vunpack.c.l.b16 %v681
  %v778 = vunpack.c.l.b16 %v682
  %v779 = vunpack.c.l.b16 %v683
  %v780 = vunpack.c.l.b16 %v684
  %v781 = vunpack.c.l.b16 %v685
  %v782 = vunpack.c.l.b16 %v686
  %v783 = vunpack.c.l.b16 %v687
  %v784 = vunpack.c.l.b16 %v688
  %v785 = vunpack.c.l.b16 %v689
  %v786 = vunpack.c.l.b16 %v690
  %v787 = vunpack.c.l.b16 %v691
  %v788 = vunpack.c.l.b16 %v692
  %v789 = vunpack.c.l.b16 %v693
  %v790 = vunpack.c.l.b16 %v694
  %v791 = vunpack.c.l.b16 %v695
  %v792 = vunpack.c.l.b16 %v696
  %v793 = vunpack.c.l.b16 %v697
  %v794 = vunpack.c.l.b16 %v698
  %v795 = vunpack.c.l.b16 %v699
  %v796 = vunpack.c.l.b16 %v700
  %v797 = vunpack.c.l.b16 %v701
  %v798 = vunpack.c.l.b16 %v702
  %v799 = vunpack.c.l.b16 %v703
  %v800 = vunpack.c.l.b16 %v704
  %v801 = vunpack.c.l.b16 %v705
  %v802 = vunpack.c.l.b16 %v706
  %v803 = vunpack.c.l.b16 %v707
  %v804 = vunpack.c.l.b16 %v708
  %v805 = vunpack.c.l.b16 %v709
  %v806 = vunpack.c.l.b16 %v710
  %v807 = vpack.c.b16 %v760, %v759
  %v808 = vpack.c.b16 %v762, %v761
  %v809 = vpack.c.b16 %v764, %v763
  %v810 = vpack.c.b16 %v766, %v765
  %v811 = vpack.c.b16 %v768, %v767
  %v812 = vpack.c.b16 %v770, %v769
  %v813 = vpack.c.b16 %v772, %v771
  %v814 = vpack.c.b16 %v774, %v773
  %v815 = vpack.c.b16 %v776, %v775
  %v816 = vpack.c.b16 %v778, %v777
  %v817 = vpack.c.b16 %v780, %v779
  %v818 = vpack.c.b16 %v782, %v781
  %v819 = vpack.c.b16 %v784, %v783
  %v820 = vpack.c.b16 %v786, %v785
  %v821 = vpack.c.b16 %v788, %v787
  %v822 = vpack.c.b16 %v790, %v789
  %v823 = vpack.c.b16 %v792, %v791
  %v824 = vpack.c.b16 %v794, %v793
  %v825 = vpack.c.b16 %v796, %v795
  %v826 = vpack.c.b16 %v798, %v797
  %v827 = vpack.c.b16 %v800, %v799
  %v828 = vpack.c.b16 %v802, %v801
  %v829 = vpack.c.b16 %v804, %v803
  %v830 = vpack.c.b16 %v806, %v805
  %855 = vmatpush.bf16.msra.mxu0 %v814
  %856 = vmatpush.bf16.msra.mxu0 %v813
  %857 = vmatpush.bf16.msra.mxu0 %v812
  %858 = vmatpush.bf16.msra.mxu0 %v811
  %859 = vmatpush.bf16.msra.mxu0 %v810
  %860 = vmatpush.bf16.msra.mxu0 %v809
  %861 = vmatpush.bf16.msra.mxu0 %v808
  %862 = vmatpush.bf16.msra.mxu0 %v807
  %863 = vmatmul.bf16.gmra.mxu0 %v654
  %v864 = vpop.f32.mrf.mxu0
  %v865 = vadd.f32 0.0, %v864
  %v866 = vpop.f32.mrf.mxu0
  %v867 = vadd.f32 0.0, %v866
  %868 = vmatmul.bf16.gmra.mxu0 %v657
  %v869 = vpop.f32.mrf.mxu0
  %v870 = vadd.f32 0.0, %v869
  %v871 = vpop.f32.mrf.mxu0
  %v872 = vadd.f32 0.0, %v871
  %873 = vmatmul.bf16.gmra.mxu0 %v660
  %v874 = vpop.f32.mrf.mxu0
  %v875 = vadd.f32 0.0, %v874
  %v876 = vpop.f32.mrf.mxu0
  %877 = vdwg.mxu0
  %878 = vmatpush.bf16.msra.mxu0 %v822
  %879 = vmatpush.bf16.msra.mxu0 %v821
  %880 = vmatpush.bf16.msra.mxu0 %v820
  %881 = vmatpush.bf16.msra.mxu0 %v819
  %882 = vmatpush.bf16.msra.mxu0 %v818
  %883 = vmatpush.bf16.msra.mxu0 %v817
  %884 = vmatpush.bf16.msra.mxu0 %v816
  %885 = vmatpush.bf16.msra.mxu0 %v815
  %886 = vmatmul.bf16.gmra.mxu0 %v655
  %v887 = vpop.f32.mrf.mxu0
  %v888 = vadd.f32 %v865, %v887
  %v889 = vpop.f32.mrf.mxu0
  %v890 = vadd.f32 %v867, %v889
  %891 = vmatmul.bf16.gmra.mxu0 %v658
  %v892 = vpop.f32.mrf.mxu0
  %v893 = vadd.f32 %v870, %v892
  %v894 = vpop.f32.mrf.mxu0
  %v895 = vadd.f32 %v872, %v894
  %896 = vmatmul.bf16.gmra.mxu0 %v661
  %v897 = vpop.f32.mrf.mxu0
  %v898 = vadd.f32 %v875, %v897
  %v899 = vpop.f32.mrf.mxu0
  %900 = vdwg.mxu0
  %901 = vmatpush.bf16.msra.mxu0 %v830
  %902 = vmatpush.bf16.msra.mxu0 %v829
  %903 = vmatpush.bf16.msra.mxu0 %v828
  %904 = vmatpush.bf16.msra.mxu0 %v827
  %905 = vmatpush.bf16.msra.mxu0 %v826
  %906 = vmatpush.bf16.msra.mxu0 %v825
  %907 = vmatpush.bf16.msra.mxu0 %v824
  %908 = vmatpush.bf16.msra.mxu0 %v823
  %909 = vmatmul.bf16.gmra.mxu0 %v656
  %v910 = vpop.f32.mrf.mxu0
  %v911 = vadd.f32 %v888, %v910
  %v912 = vpop.f32.mrf.mxu0
  %v913 = vadd.f32 %v890, %v912
  %914 = vmatmul.bf16.gmra.mxu0 %v659
  %v915 = vpop.f32.mrf.mxu0
  %v916 = vadd.f32 %v893, %v915
  %v917 = vpop.f32.mrf.mxu0
  %v918 = vadd.f32 %v895, %v917
  %919 = vmatmul.bf16.gmra.mxu0 %v662
  %v920 = vpop.f32.mrf.mxu0
  %v921 = vadd.f32 %v898, %v920
  %v922 = vpop.f32.mrf.mxu0
  %923 = vdwg.mxu0
  %v924 = vld [vmem:[%s8] sm:$0x1]
  %v925 = vld [vmem:[%s9] sm:$0x1]
  %v926 = vmul.f32 %v911, %v911
  %v927 = vmul.f32 %v913, %v913
  %v928 = vmul.f32 %v916, %v916
  %v929 = vmul.f32 %v918, %v918
  %v930 = vmul.f32 %v921, %v921
  %931 = vmatpush.msra.mxu0 0.0
  %932 = vmatpush.msra.mxu0 0.0
  %933 = vmatpush.msra.mxu0 0.0
  %934 = vmatpush.msra.mxu0 0.0
  %935 = vmatpush.msra.mxu0 0.0
  %936 = vmatpush.msra.mxu0 0.0
  %937 = vmatpush.msra.mxu0 0.0
  %938 = vmatpush.msra.mxu0 0.0
  %939 = vmatpush.msra.mxu0 0.0
  %940 = vmatpush.msra.mxu0 0.0
  %941 = vmatpush.msra.mxu0 0.0
  %942 = vmatpush.msra.mxu0 %v921
  %943 = vmatpush.msra.mxu0 %v918
  %944 = vmatpush.msra.mxu0 %v916
  %945 = vmatpush.msra.mxu0 %v913
  %946 = vmatpush.msra.mxu0 %v911
  %947 = vmatmul.f32.gmra.mxu0 %v426
  %v948 = vpop.f32.mrf.mxu0
  %v949 = vadd.f32 0.0, %v948
  %950 = vdwg.mxu0
  %951 = vmatpush.msra.mxu0 0.0
  %952 = vmatpush.msra.mxu0 0.0
  %953 = vmatpush.msra.mxu0 0.0
  %954 = vmatpush.msra.mxu0 0.0
  %955 = vmatpush.msra.mxu0 0.0
  %956 = vmatpush.msra.mxu0 0.0
  %957 = vmatpush.msra.mxu0 0.0
  %958 = vmatpush.msra.mxu0 0.0
  %959 = vmatpush.msra.mxu0 0.0
  %960 = vmatpush.msra.mxu0 0.0
  %961 = vmatpush.msra.mxu0 0.0
  %962 = vmatpush.msra.mxu0 %v930
  %963 = vmatpush.msra.mxu0 %v929
  %964 = vmatpush.msra.mxu0 %v928
  %965 = vmatpush.msra.mxu0 %v927
  %966 = vmatpush.msra.mxu0 %v926
  %967 = vmatmul.f32.gmra.mxu0 %v426
  %v968 = vpop.f32.mrf.mxu0
  %v969 = vadd.f32 0.0, %v968
  %970 = vdwg.mxu0
  %971 = vmatpush.msra.mxu0 %v76
  %972 = vmatpush.msra.mxu0 %v74
  %973 = vmatpush.msra.mxu0 %v72
  %974 = vmatpush.msra.mxu0 %v70
  %975 = vmatpush.msra.mxu0 %v68
  %976 = vmatpush.msra.mxu0 %v66
  %977 = vmatpush.msra.mxu0 %v64
  %978 = vmatpush.msra.mxu0 %v62
  %979 = vmatpush.msra.mxu0 %v60
  %980 = vmatpush.msra.mxu0 %v58
  %981 = vmatpush.msra.mxu0 %v56
  %982 = vmatpush.msra.mxu0 %v54
  %983 = vmatpush.msra.mxu0 %v52
  %984 = vmatpush.msra.mxu0 %v50
  %985 = vmatpush.msra.mxu0 %v48
  %986 = vmatpush.msra.mxu0 %v46
  %987 = vmatmul.f32.gmra.mxu0 %v949
  %v988 = vpop.f32.mrf.mxu0
  %v989 = vadd.f32 0.0, %v988
  %990 = vdwg.mxu0
  %991 = vmatpush.msra.mxu0 %v108
  %992 = vmatpush.msra.mxu0 %v106
  %993 = vmatpush.msra.mxu0 %v104
  %994 = vmatpush.msra.mxu0 %v102
  %995 = vmatpush.msra.mxu0 %v100
  %996 = vmatpush.msra.mxu0 %v98
  %997 = vmatpush.msra.mxu0 %v96
  %998 = vmatpush.msra.mxu0 %v94
  %999 = vmatpush.msra.mxu0 %v92
  %1000 = vmatpush.msra.mxu0 %v90
  %1001 = vmatpush.msra.mxu0 %v88
  %1002 = vmatpush.msra.mxu0 %v86
  %1003 = vmatpush.msra.mxu0 %v84
  %1004 = vmatpush.msra.mxu0 %v82
  %1005 = vmatpush.msra.mxu0 %v80
  %1006 = vmatpush.msra.mxu0 %v78
  %1007 = vmatmul.f32.gmra.mxu0 %v969
  %v1008 = vpop.f32.mrf.mxu0
  %v1009 = vadd.f32 %v989, %v1008
  %1010 = vdwg.mxu0
  %1011 = vmatpush.msra.mxu0 %v77
  %1012 = vmatpush.msra.mxu0 %v75
  %1013 = vmatpush.msra.mxu0 %v73
  %1014 = vmatpush.msra.mxu0 %v71
  %1015 = vmatpush.msra.mxu0 %v69
  %1016 = vmatpush.msra.mxu0 %v67
  %1017 = vmatpush.msra.mxu0 %v65
  %1018 = vmatpush.msra.mxu0 %v63
  %1019 = vmatpush.msra.mxu0 %v61
  %1020 = vmatpush.msra.mxu0 %v59
  %1021 = vmatpush.msra.mxu0 %v57
  %1022 = vmatpush.msra.mxu0 %v55
  %1023 = vmatpush.msra.mxu0 %v53
  %1024 = vmatpush.msra.mxu0 %v51
  %1025 = vmatpush.msra.mxu0 %v49
  %1026 = vmatpush.msra.mxu0 %v47
  %1027 = vmatmul.f32.gmra.mxu0 %v949
  %v1028 = vpop.f32.mrf.mxu0
  %v1029 = vadd.f32 0.0, %v1028
  %1030 = vdwg.mxu0
  %1031 = vmatpush.msra.mxu0 %v109
  %1032 = vmatpush.msra.mxu0 %v107
  %1033 = vmatpush.msra.mxu0 %v105
  %1034 = vmatpush.msra.mxu0 %v103
  %1035 = vmatpush.msra.mxu0 %v101
  %1036 = vmatpush.msra.mxu0 %v99
  %1037 = vmatpush.msra.mxu0 %v97
  %1038 = vmatpush.msra.mxu0 %v95
  %1039 = vmatpush.msra.mxu0 %v93
  %1040 = vmatpush.msra.mxu0 %v91
  %1041 = vmatpush.msra.mxu0 %v89
  %1042 = vmatpush.msra.mxu0 %v87
  %1043 = vmatpush.msra.mxu0 %v85
  %1044 = vmatpush.msra.mxu0 %v83
  %1045 = vmatpush.msra.mxu0 %v81
  %1046 = vmatpush.msra.mxu0 %v79
  %1047 = vmatmul.f32.gmra.mxu0 %v969
  %v1048 = vpop.f32.mrf.mxu0
  %v1049 = vadd.f32 %v1029, %v1048
  %1050 = vdwg.mxu0
  %v1051 = vmul.f32 %v1009, 0.001953125
  %v1052 = vmul.f32 %v1049, 0.001953125
  %v1053 = vmul.f32 %v1051, %v1051
  %v1054 = vsub.f32 %v1052, %v1053
  %v1055 = vadd.f32 %v1054, 1e-05
  %v1056 = vrsqrt.pop %v1055
  %v1057 = vmul.f32 %v1056, %v1055
  %v1058 = vmul.f32 %v1057, %v1056
  %v1059 = vmul.f32 0.5, %v1058
  %v1060 = vsub.f32 1.5, %v1059
  %v1061 = vmul.f32 %v1056, %v1060
  %vm1062 = vweird.f32 %v1055
  %vm1063 = vweird.f32 %v1056
  %vm1064 = vmor %vm1062, %vm1063
  %v1065 = vsel %vm1064, %v1056, %v1061
  %v1066 = vperm.slane %v1051, 0
  %v1067 = vsub.f32 %v911, %v1066
  %v1068 = vsub.f32 %v913, %v1066
  %v1069 = vsub.f32 %v916, %v1066
  %v1070 = vsub.f32 %v918, %v1066
  %v1071 = vsub.f32 %v921, %v1066
  %v1072 = vmul.f32 %v1065, %v924
  %v1073 = vperm.slane %v1072, 0
  %v1074 = vmul.f32 %v1067, %v1073
  %v1075 = vmul.f32 %v1068, %v1073
  %v1076 = vmul.f32 %v1069, %v1073
  %v1077 = vmul.f32 %v1070, %v1073
  %v1078 = vmul.f32 %v1071, %v1073
  %v1080 = vperm.slane %v925, 0
  %v1082 = vadd.f32 %v1074, %v1080
  %v1083 = vadd.f32 %v1075, %v1080
  %v1084 = vadd.f32 %v1076, %v1080
  %v1085 = vadd.f32 %v1077, %v1080
  %v1086 = vadd.f32 %v1078, %v1080
  %v1087 = vadd.f32 %v1082, %v35
  %v1088 = vadd.f32 %v1083, %v36
  %v1089 = vadd.f32 %v1084, %v37
  %v1090 = vadd.f32 %v1085, %v38
  %v1091 = vadd.f32 %v1086, %v39
  %v1092 = vmax.f32 %v1087, 0.0
  %v1093 = vmax.f32 %v1088, 0.0
  %v1094 = vmax.f32 %v1089, 0.0
  %v1095 = vmax.f32 %v1090, 0.0
  %v1096 = vmax.f32 %v1091, 0.0
  %1097 = vst [vmem:[%s10] sm:$0xff] %v1092
  %1098 = vst [vmem:[%s10 + $0x8] sm:$0xff] %v1093
  %1099 = vst [vmem:[%s10 + $0x10] sm:$0xff] %v1094
  %1100 = vst [vmem:[%s10 + $0x18] sm:$0xff] %v1095
  %1101 = vst [vmem:[%s10 + $0x20] sm:$0xff] %v1096
  // Predicated region
  $region42: #{basic_block_forward.1} parent=0 // pred_check
    _
  $region43: #{basic_block_forward.1} parent=0 // pred_check_branch
    %1103 = sbr.rel (0) target = $region45
  $region44: #{basic_block_forward.1} parent=0 // pred_region
    _
  $region45: #{basic_block_forward.1} parent=0 // pred_fallthru
    _
  // Predicated region
  $region46: #{basic_block_forward.1} parent=0 // pred_check
    _
  $region47: #{basic_block_forward.1} parent=0 // pred_check_branch
    %1105 = sbr.rel (0) target = $region49
  $region48: #{basic_block_forward.1} parent=0 // pred_region
    _
  $region49: #{basic_block_forward.1} parent=0 // pred_fallthru
    _

</llo_original>
